<compile_context>
chip_gen: v5e
topology: v5e:2x2
jax: 0.10.0
libtpu: 0.0.40
codegen_flags: <defaults>
</compile_context>

<pallas_src>
import functools

import jax
import jax.numpy as jnp
from jax.experimental import pallas as pl
from jax.experimental.pallas import tpu as pltpu


def _round_up(v, m):
    return -(-v // m) * m


def _pick_token_tile(n_tok, max_tile):
    """Largest multiple of 128 that divides n_tok (<= max_tile), else all of one
    image's tokens (full-dim blocks are always layout-legal)."""
    best = n_tok
    t = 128
    while t <= min(n_tok, max_tile):
        if n_tok % t == 0:
            best = t
        t += 128
    return best


def _patch_embed_kernel(p_ref, w_ref, b_ref, o_ref, *, e_out):
    # p_ref: (1, TT, Kp) patch tile (compute dtype); w_ref: (Kp, Ep) weight;
    # b_ref: (1, Ep) f32 bias; o_ref: (1, e_out, TT) channels-major output.
    acc = jnp.dot(p_ref[0], w_ref[...], preferred_element_type=jnp.float32)
    acc = acc + b_ref[...]                     # f32 bias add (v5e VPU-safe)
    acc_t = acc.T                              # (Ep, TT): 2-D XLU transpose in VMEM
    o_ref[0] = acc_t[:e_out, :].astype(o_ref.dtype)


def patch_embedding(x, weight, bias, patch_size, *,
                    compute_dtype=jnp.bfloat16, max_token_tile=512):
    """x: (B, C, H, W) NCHW; weight: (E, C, p, p); bias: (E,) -> (B, E, Ho, Wo).

    Matches nn.Conv2d(C, E, kernel_size=p, stride=p). Default compute_dtype is
    bf16 (MXU operands) with f32 accumulation; use jnp.float32 for exact math.
    """
    B, C, H, W = x.shape
    E = weight.shape[0]
    p = patch_size
    assert H % p == 0 and W % p == 0, "H, W must be divisible by patch_size"
    Ho, Wo = H // p, W // p
    n_tok = Ho * Wo
    K = C * p * p
    out_dtype = x.dtype

    # --- host-side im2col (one fused XLA pass: read x, write compute-dtype
    # patch matrix).  TODO(synk): fold this gather into the kernel to remove it.
    xc = x.astype(compute_dtype)
    patches = xc.reshape(B, C, Ho, p, Wo, p)
    patches = patches.transpose(0, 2, 4, 1, 3, 5)        # (B, Ho, Wo, C, p, p)
    patches = patches.reshape(B, n_tok, K)

    # MXU operand padding (exact: zero K rows / E cols).  The *output* keeps the
    # true E so the NCHW result below is a free reshape (no slice pass).
    k_pad = _round_up(K, 128)
    e_pad = _round_up(E, 128)
    if k_pad != K:
        patches = jnp.pad(patches, ((0, 0), (0, 0), (0, k_pad - K)))
    w_flat = weight.astype(compute_dtype).reshape(E, K).T          # (K, E)
    if (k_pad, e_pad) != (K, E):
        w_flat = jnp.pad(w_flat, ((0, k_pad - K), (0, e_pad - E)))
    b_row = bias.astype(jnp.float32).reshape(1, E)
    if e_pad != E:
        b_row = jnp.pad(b_row, ((0, 0), (0, e_pad - E)))

    # --- token tiling: either all tokens of one image (full-dim block, always
    # legal) or a 128-multiple divisor of it (lane-dense output stores).
    t_tile = _pick_token_tile(n_tok, max_token_tile)
    if t_tile != n_tok:
        assert t_tile % 128 == 0 and n_tok % t_tile == 0
    n_t = n_tok // t_tile
    grid = (B, n_t)

    cb = jnp.dtype(compute_dtype).itemsize
    ob = jnp.dtype(out_dtype).itemsize

    # --- generation-aware VMEM budget (v7x: 64 MiB, v5e/v6e: 128 MiB).
    try:
        vmem_cap = int(pltpu.get_tpu_info().vmem_capacity_bytes)
    except Exception:  # conservative default if the query is unavailable
        vmem_cap = 64 * 1024 * 1024
    vmem_need = (2 * t_tile * k_pad * cb       # double-buffered patch tiles
                 + 1 * k_pad * e_pad * cb      # weight (single-buffered)
                 + 1 * e_pad * 4               # bias
                 + 2 * E * t_tile * ob         # double-buffered output tiles
                 + 2 * t_tile * e_pad * 4)     # f32 accumulator + transpose temp
    vmem_limit = min(int(vmem_cap * 0.8),
                     max(vmem_need + (4 << 20), 16 << 20))
    # TODO(synk): if vmem_need ever exceeds the v7x cap (very large E*K), add a
    # third "parallel" grid axis tiling E instead of holding the full e_pad slab.

    cost = pl.CostEstimate(
        flops=2 * B * n_tok * k_pad * e_pad,
        transcendentals=0,
        bytes_accessed=(B * n_tok * k_pad * cb + k_pad * e_pad * cb
                        + e_pad * 4 + B * E * n_tok * ob),
    )

    kernel = functools.partial(_patch_embed_kernel, e_out=E)
    out_shape = jax.ShapeDtypeStruct((B, E, n_tok), out_dtype)

    def run(single_buffer_invariants):
        inv_kwargs = (dict(pipeline_mode=pl.Buffered(1))
                      if single_buffer_invariants else {})
        grid_spec = pltpu.PrefetchScalarGridSpec(
            num_scalar_prefetch=0,
            grid=grid,
            in_specs=[
                pl.BlockSpec((1, t_tile, k_pad), lambda b, t: (b, t, 0)),
                pl.BlockSpec((k_pad, e_pad), lambda b, t: (0, 0), **inv_kwargs),
                pl.BlockSpec((1, e_pad), lambda b, t: (0, 0), **inv_kwargs),
            ],
            out_specs=pl.BlockSpec((1, E, t_tile), lambda b, t: (b, 0, t)),
        )
        return pl.pallas_call(
            kernel,
            out_shape=out_shape,
            grid_spec=grid_spec,
            compiler_params=pltpu.CompilerParams(
                dimension_semantics=("parallel", "parallel"),
                vmem_limit_bytes=int(vmem_limit)),
            cost_estimate=cost,
        )(patches, w_flat, b_row)

    try:
        out = run(single_buffer_invariants=True)
    except Exception:
        # Fallback: default double buffering for the grid-invariant operands.
        out = run(single_buffer_invariants=False)

    # Channels-major (B, E, Ho*Wo) slab -> NCHW is a free reshape (no transpose
    # or slice pass; E was never padded in the output).
    return out.reshape(B, E, Ho, Wo)


if __name__ == "__main__":
    # Small, module-consistent shapes.
    patch_size = 4
    in_channels = 4
    embedding_dim = 32
    B, H, W = 2, 16, 16

    key = jax.random.PRNGKey(0)
    kx, kw, kb = jax.random.split(key, 3)

    x = jax.random.normal(kx, (B, in_channels, H, W), dtype=jnp.float32)
    fan_in = in_channels * patch_size * patch_size
    weight = jax.random.normal(
        kw, (embedding_dim, in_channels, patch_size, patch_size),
        dtype=jnp.float32) * (1.0 / fan_in) ** 0.5
    bias = jax.random.normal(kb, (embedding_dim,), dtype=jnp.float32) * 0.01

    out = patch_embedding(x, weight, bias, patch_size)
    out = jax.block_until_ready(out)

    # Reference strided conv (pure JAX).  Operands are rounded to bf16 (the
    # kernel's default compute dtype) so the check isolates the kernel math
    # from the documented bf16 operand quantization.
    x_q = x.astype(jnp.bfloat16).astype(jnp.float32)
    w_q = weight.astype(jnp.bfloat16).astype(jnp.float32)
    ref = jax.lax.conv_general_dilated(
        x_q, w_q,
        window_strides=(patch_size, patch_size),
        padding="VALID",
        dimension_numbers=("NCHW", "OIHW", "NCHW"),
        precision=jax.lax.Precision.HIGHEST,
    ) + bias.reshape(1, embedding_dim, 1, 1)

    assert out.shape == (B, embedding_dim, H // patch_size, W // patch_size)
    assert out.dtype == x.dtype
    assert jnp.allclose(out, ref, atol=2e-3, rtol=2e-3)
    print("KERNEL_OK")
</pallas_src>

<mosaic_0001>
module attributes {stable_mosaic.version = 11 : i64} {
  func.func @_patch_embed_kernel(%arg0: i32, %arg1: i32, %arg2: memref<1x16x128xbf16, #tpu.memory_space<vmem>>, %arg3: memref<128x128xbf16, #tpu.memory_space<vmem>>, %arg4: memref<1x128xf32, #tpu.memory_space<vmem>>, %arg5: memref<1x32x16xf32, #tpu.memory_space<vmem>>) attributes {dimension_semantics = [#tpu.dimension_semantics<parallel>, #tpu.dimension_semantics<parallel>], iteration_bounds = array<i64: 2, 1>, scalar_prefetch = 0 : i64, scratch_operands = 0 : i64, tpu.core_type = #tpu.core_type<tc>, window_params = [{transform_indices = @transform_0, window_bounds = array<i64: 1, 16, 128>}, {pipeline_mode = #tpu.pipeline_mode<synchronous>, transform_indices = @transform_1, window_bounds = array<i64: 128, 128>}, {pipeline_mode = #tpu.pipeline_mode<synchronous>, transform_indices = @transform_2, window_bounds = array<i64: 1, 128>}, {transform_indices = @transform_3, window_bounds = array<i64: 1, 32, 16>}]} {
    %c0 = arith.constant 0 : index
    %c0_0 = arith.constant 0 : index
    %c0_1 = arith.constant 0 : index
    %0 = vector.load %arg2[%c0, %c0_0, %c0_1] : memref<1x16x128xbf16, #tpu.memory_space<vmem>>, vector<1x16x128xbf16>
    %1 = vector.shape_cast %0 : vector<1x16x128xbf16> to vector<16x128xbf16>
    %c0_2 = arith.constant 0 : index
    %c0_3 = arith.constant 0 : index
    %2 = vector.load %arg3[%c0_2, %c0_3] : memref<128x128xbf16, #tpu.memory_space<vmem>>, vector<128x128xbf16>
    %cst = arith.constant dense<0.000000e+00> : vector<16x128xf32>
    %3 = tpu.matmul %1, %2, %cst {dimension_numbers = #tpu.dot_dimension_numbers<[1], [0], [0], [1], [0, 0, 1, 1], [], []>} : vector<16x128xbf16>, vector<128x128xbf16>, vector<16x128xf32> -> vector<16x128xf32>
    %c0_4 = arith.constant 0 : index
    %c0_5 = arith.constant 0 : index
    %4 = vector.load %arg4[%c0_4, %c0_5] : memref<1x128xf32, #tpu.memory_space<vmem>>, vector<1x128xf32>
    %5 = vector.broadcast %4 : vector<1x128xf32> to vector<16x128xf32>
    %6 = arith.addf %3, %5 : vector<16x128xf32>
    %7 = tpu.transpose %6, [1, 0] : vector<16x128xf32> -> vector<128x16xf32>
    %8 = vector.extract_strided_slice %7 {offsets = [0, 0], sizes = [32, 16], strides = [1, 1]} : vector<128x16xf32> to vector<32x16xf32>
    %c0_6 = arith.constant 0 : index
    %c0_7 = arith.constant 0 : index
    %c0_8 = arith.constant 0 : index
    %9 = vector.load %arg5[%c0_6, %c0_7, %c0_8] : memref<1x32x16xf32, #tpu.memory_space<vmem>>, vector<1x32x16xf32>
    %10 = vector.shape_cast %9 : vector<1x32x16xf32> to vector<32x16xf32>
    %11 = vector.shape_cast %8 : vector<32x16xf32> to vector<1x32x16xf32>
    tpu.vector_store %arg5[%c0_6, %c0_7, %c0_8], %11 {strides = array<i32>} : memref<1x32x16xf32, #tpu.memory_space<vmem>>, vector<1x32x16xf32>,
    return
  }
  func.func @transform_0(%arg0: i32, %arg1: i32) -> (i32, i32, i32) {
    %c0_i32 = arith.constant 0 : i32
    %c0_i32_0 = arith.constant 0 : i32
    return %arg0, %arg1, %c0_i32 : i32, i32, i32
  }
  func.func @transform_1(%arg0: i32, %arg1: i32) -> (i32, i32) {
    %c0_i32 = arith.constant 0 : i32
    %c0_i32_0 = arith.constant 0 : i32
    %c0_i32_1 = arith.constant 0 : i32
    return %c0_i32, %c0_i32_0 : i32, i32
  }
  func.func @transform_2(%arg0: i32, %arg1: i32) -> (i32, i32) {
    %c0_i32 = arith.constant 0 : i32
    %c0_i32_0 = arith.constant 0 : i32
    %c0_i32_1 = arith.constant 0 : i32
    return %c0_i32, %c0_i32_0 : i32, i32
  }
  func.func @transform_3(%arg0: i32, %arg1: i32) -> (i32, i32, i32) {
    %c0_i32 = arith.constant 0 : i32
    %c0_i32_0 = arith.constant 0 : i32
    return %arg0, %c0_i32, %arg1 : i32, i32, i32
  }
}

module attributes {stable_mosaic.version = 11 : i64} {
  func.func @_patch_embed_kernel(%arg0: i32, %arg1: i32, %arg2: memref<1x16x128xbf16, #tpu.memory_space<vmem>>, %arg3: memref<128x128xbf16, #tpu.memory_space<vmem>>, %arg4: memref<1x128xf32, #tpu.memory_space<vmem>>, %arg5: memref<1x32x16xf32, #tpu.memory_space<vmem>>) attributes {dimension_semantics = [#tpu.dimension_semantics<parallel>, #tpu.dimension_semantics<parallel>], iteration_bounds = array<i64: 2, 1>, scalar_prefetch = 0 : i64, scratch_operands = 0 : i64, tpu.core_type = #tpu.core_type<tc>, window_params = [{transform_indices = @transform_0, window_bounds = array<i64: 1, 16, 128>}, {pipeline_mode = #tpu.pipeline_mode<synchronous>, transform_indices = @transform_1, window_bounds = array<i64: 128, 128>}, {pipeline_mode = #tpu.pipeline_mode<synchronous>, transform_indices = @transform_2, window_bounds = array<i64: 1, 128>}, {transform_indices = @transform_3, window_bounds = array<i64: 1, 32, 16>}]} {
    %c0 = arith.constant 0 : index
    %c0_0 = arith.constant 0 : index
    %c0_1 = arith.constant 0 : index
    %0 = vector.load %arg2[%c0, %c0_0, %c0_1] : memref<1x16x128xbf16, #tpu.memory_space<vmem>>, vector<1x16x128xbf16>
    %1 = vector.shape_cast %0 : vector<1x16x128xbf16> to vector<16x128xbf16>
    %c0_2 = arith.constant 0 : index
    %c0_3 = arith.constant 0 : index
    %2 = vector.load %arg3[%c0_2, %c0_3] : memref<128x128xbf16, #tpu.memory_space<vmem>>, vector<128x128xbf16>
    %cst = arith.constant dense<0.000000e+00> : vector<16x128xf32>
    %3 = tpu.matmul %1, %2, %cst {dimension_numbers = #tpu.dot_dimension_numbers<[1], [0], [0], [1], [0, 0, 1, 1], [], []>} : vector<16x128xbf16>, vector<128x128xbf16>, vector<16x128xf32> -> vector<16x128xf32>
    %c0_4 = arith.constant 0 : index
    %c0_5 = arith.constant 0 : index
    %4 = vector.load %arg4[%c0_4, %c0_5] : memref<1x128xf32, #tpu.memory_space<vmem>>, vector<1x128xf32>
    %5 = vector.broadcast %4 : vector<1x128xf32> to vector<16x128xf32>
    %6 = arith.addf %3, %5 : vector<16x128xf32>
    %7 = tpu.transpose %6, [1, 0] : vector<16x128xf32> -> vector<128x16xf32>
    %8 = vector.extract_strided_slice %7 {offsets = [0, 0], sizes = [32, 16], strides = [1, 1]} : vector<128x16xf32> to vector<32x16xf32>
    %c0_6 = arith.constant 0 : index
    %c0_7 = arith.constant 0 : index
    %c0_8 = arith.constant 0 : index
    %9 = vector.load %arg5[%c0_6, %c0_7, %c0_8] : memref<1x32x16xf32, #tpu.memory_space<vmem>>, vector<1x32x16xf32>
    %10 = vector.shape_cast %9 : vector<1x32x16xf32> to vector<32x16xf32>
    %11 = vector.shape_cast %8 : vector<32x16xf32> to vector<1x32x16xf32>
    tpu.vector_store %arg5[%c0_6, %c0_7, %c0_8], %11 {strides = array<i32>} : memref<1x32x16xf32, #tpu.memory_space<vmem>>, vector<1x32x16xf32>,
    return
  }
  func.func @transform_0(%arg0: i32, %arg1: i32) -> (i32, i32, i32) {
    %c0_i32 = arith.constant 0 : i32
    %c0_i32_0 = arith.constant 0 : i32
    return %arg0, %arg1, %c0_i32 : i32, i32, i32
  }
  func.func @transform_1(%arg0: i32, %arg1: i32) -> (i32, i32) {
    %c0_i32 = arith.constant 0 : i32
    %c0_i32_0 = arith.constant 0 : i32
    %c0_i32_1 = arith.constant 0 : i32
    return %c0_i32, %c0_i32_0 : i32, i32
  }
  func.func @transform_2(%arg0: i32, %arg1: i32) -> (i32, i32) {
    %c0_i32 = arith.constant 0 : i32
    %c0_i32_0 = arith.constant 0 : i32
    %c0_i32_1 = arith.constant 0 : i32
    return %c0_i32, %c0_i32_0 : i32, i32
  }
  func.func @transform_3(%arg0: i32, %arg1: i32) -> (i32, i32, i32) {
    %c0_i32 = arith.constant 0 : i32
    %c0_i32_0 = arith.constant 0 : i32
    return %arg0, %c0_i32, %arg1 : i32, i32, i32
  }
}

</mosaic_0001>

<llo_original>
// kernel: tpu_custom_call.1
$region0: #{tpu_custom_call.1}
  #allocation0 [shape = 'u32[]', space=smem, size = 0x4, offset = 0x4, fixed_abs, tag = 'smem constant byte address 0x4 - core index']
  #allocation1 [shape = 'u32[72,128]{1,0:T(1,128)}', space=vmem, size = 0x9000, scoped, tag = 'internal scratch']
  %s0 = inlined_call_operand.hbm [shape: bf16[2,16,128], index: 0, kind: input, shape index: {}]
  %s1 = inlined_call_operand.hbm [shape: bf16[128,128], index: 1, kind: input, shape index: {}]
  %s2 = inlined_call_operand.vmem [shape: f32[1,128], index: 2, kind: input, shape index: {}]
  %s3 = inlined_call_operand.vmem [shape: f32[2,32,16], index: 3, kind: output, shape index: {}]
  %s4 = sld [smem:[#allocation0]]
  $region53: #{tpu_custom_call.1} parent=0
    _
  %s6 = ssub.s32 1, %s4
  %s7 = scalar_select 0, %s6, %s4
  $region1: #{tpu_custom_call.1} parent=0
    #allocation2 [shape = 'u8[8192]{0}', space=vmem, size = 0x2000, scoped, tag = 'input window, operand 0']
    #allocation3 [shape = 's32[2]{0}', space=sflag, size = 0x8, scoped, tag = 'scoped memory for tpu_custom_call.1']
    #allocation4 [shape = 'u8[32768]{0}', space=vmem, size = 0x8000, scoped, tag = 'input window, operand 1, single buffered']
    #allocation5 [shape = 's32[1]{0}', space=sflag, size = 0x4, scoped, tag = 'scoped memory for tpu_custom_call.1']
    %8 = vsyncpa [#allocation3], 0
    %s9 = scalar_lea.sflag [#allocation3], 1
    %10 = vsyncpa %s9, 0
    %11 = vsyncpa [#allocation5], 0
    loop: start=0, step=1, limit=4
    $region2: #{tpu_custom_call.1} parent=1 // loop_pre_header
      _
    $region3: #{tpu_custom_call.1} parent=1 // loop_header
      %s13 = sphi 0, %s17
      %p14 = scmp.ge.s32.totalorder %s13, 4
      %s20 = sphi 0, %s32
      %s21 = sphi 0, %s28
      %s22 = sphi 0, %s20
      %s23 = sphi 0, %s21
      %s24 = sphi 0, %s22
      %s25 = sphi 0, %s23
      %s37 = sphi 0, %s39
      %s40 = sphi 0, %s37
      %s41 = sphi 0, %s40
      %s57 = sphi 0, %s41
      %s61 = sphi 0, %s61
      %s63 = sphi 0, %s61
      %s64 = sphi 0, %s63
      %s78 = sphi 0, %s64
      %s82 = sphi 0, %s82
      %s84 = sphi 0, %s82
      %s85 = sphi 0, %s84
      %s99 = sphi 0, %s85
      %s107 = sphi 0, %s109
      %s110 = sphi 0, %s107
      %s111 = sphi 0, %s110
      %s127 = sphi 0, %s111
    $region4: #{tpu_custom_call.1} parent=1 // loop_header_branch
      %16 = sbr.rel (%p14) target = $region8
    $region5: #{tpu_custom_call.1} parent=1 // loop_body
      %s18 = ssub.s32 %s13, 1
      %s19 = ssub.s32 %s13, 2
      %s26 = sadd.s32 1, %s21
      %p27 = scmp.ge.s32.totalorder %s26, 1
      %s28 = scalar_select %p27, 0, %s26
      %s29 = sadd.s32 1, %s20
      %s30 = scalar_select %p27, %s29, %s20
      %p31 = scmp.ge.s32.totalorder %s30, 2
      %s32 = scalar_select %p31, 0, %s30
      %s33 = ssub.s32 %s20, %s32
      %s34 = ssub.s32 %s21, %s28
      %s35 = sor.u32 %s33, %s34
      %p36 = scmp.eq.s32.totalorder %s35, 0
      %s38 = sadd.s32 %s37, 1
      %s39 = scalar_select %p36, %s37, %s38
      %p42 = pneg %p36
      %p43 = scmp.eq.s32.totalorder %s13, 1
      %p44 = por %p42, %p43
      %p45 = scmp.ne.s32.totalorder %s37, %s40
      %p46 = scmp.eq.s32.totalorder %s13, 0
      %p47 = por %p45, %p46
      %p48 = scmp.ne.s32.totalorder %s37, %s40
      %p49 = scmp.eq.s32.totalorder %s18, 1
      %p50 = por %p48, %p49
      %p51 = scmp.ne.s32.totalorder %s40, %s41
      %p52 = scmp.eq.s32.totalorder %s18, 0
      %p53 = por %p51, %p52
      %p54 = scmp.ne.s32.totalorder %s40, %s41
      %p55 = scmp.eq.s32.totalorder %s19, 1
      %p56 = por %p54, %p55
      %p58 = scmp.ne.s32.totalorder %s41, %s57
      %p59 = scmp.eq.s32.totalorder %s19, 0
      %p60 = por %p58, %p59
      %s62 = sadd.s32 %s61, 1
      %p65 = scmp.eq.s32.totalorder %s13, 1
      %p66 = scmp.ne.s32.totalorder %s61, %s63
      %p67 = scmp.eq.s32.totalorder %s13, 0
      %p68 = por %p66, %p67
      %p69 = scmp.ne.s32.totalorder %s61, %s63
      %p70 = scmp.eq.s32.totalorder %s18, 1
      %p71 = por %p69, %p70
      %p72 = scmp.ne.s32.totalorder %s63, %s64
      %p73 = scmp.eq.s32.totalorder %s18, 0
      %p74 = por %p72, %p73
      %p75 = scmp.ne.s32.totalorder %s63, %s64
      %p76 = scmp.eq.s32.totalorder %s19, 1
      %p77 = por %p75, %p76
      %p79 = scmp.ne.s32.totalorder %s64, %s78
      %p80 = scmp.eq.s32.totalorder %s19, 0
      %p81 = por %p79, %p80
      %s83 = sadd.s32 %s82, 1
      %p86 = scmp.eq.s32.totalorder %s13, 1
      %p87 = scmp.ne.s32.totalorder %s82, %s84
      %p88 = scmp.eq.s32.totalorder %s13, 0
      %p89 = por %p87, %p88
      %p90 = scmp.ne.s32.totalorder %s82, %s84
      %p91 = scmp.eq.s32.totalorder %s18, 1
      %p92 = por %p90, %p91
      %p93 = scmp.ne.s32.totalorder %s84, %s85
      %p94 = scmp.eq.s32.totalorder %s18, 0
      %p95 = por %p93, %p94
      %p96 = scmp.ne.s32.totalorder %s84, %s85
      %p97 = scmp.eq.s32.totalorder %s19, 1
      %p98 = por %p96, %p97
      %p100 = scmp.ne.s32.totalorder %s85, %s99
      %p101 = scmp.eq.s32.totalorder %s19, 0
      %p102 = por %p100, %p101
      %s103 = ssub.s32 %s20, %s32
      %s104 = ssub.s32 %s21, %s28
      %s105 = sor.u32 %s103, %s104
      %p106 = scmp.eq.s32.totalorder %s105, 0
      %s108 = sadd.s32 %s107, 1
      %s109 = scalar_select %p106, %s107, %s108
      %p112 = pneg %p106
      %p113 = scmp.eq.s32.totalorder %s13, 1
      %p114 = por %p112, %p113
      %p115 = scmp.ne.s32.totalorder %s107, %s110
      %p116 = scmp.eq.s32.totalorder %s13, 0
      %p117 = por %p115, %p116
      %p118 = scmp.ne.s32.totalorder %s107, %s110
      %p119 = scmp.eq.s32.totalorder %s18, 1
      %p120 = por %p118, %p119
      %p121 = scmp.ne.s32.totalorder %s110, %s111
      %p122 = scmp.eq.s32.totalorder %s18, 0
      %p123 = por %p121, %p122
      %p124 = scmp.ne.s32.totalorder %s110, %s111
      %p125 = scmp.eq.s32.totalorder %s19, 1
      %p126 = por %p124, %p125
      %p128 = scmp.ne.s32.totalorder %s111, %s127
      %p129 = scmp.eq.s32.totalorder %s19, 0
      %p130 = por %p128, %p129
      %p131 = scmp.le.s32.totalorder 1, %s13
      %p132 = scmp.lt.s32.totalorder %s13, 3
      %p133 = pnand %p131, %p132
      %p134 = pneg %p133
      // Predicated region
      $region9: #{tpu_custom_call.1} parent=5 // pred_check
        _
      $region10: #{tpu_custom_call.1} parent=5 // pred_check_branch
        %136 = sbr.rel (%p133) target = $region12
      $region11: #{tpu_custom_call.1} parent=5 // pred_region
        %s137 = ssub.s32 %s13, 1
        // Predicated region
        $region13: #{tpu_custom_call.1} parent=11 // pred_check
          %p138 = pneg %p74
        $region14: #{tpu_custom_call.1} parent=11 // pred_check_branch
          %140 = sbr.rel (%p138) target = $region16
        $region15: #{tpu_custom_call.1} parent=11 // pred_region
          %142 = vsyncadd [#allocation5], 0
          %s143 = sshll.u32 %s1, 4
          %s144 = int_to_ptr.hbm [resolvable:$true] %s143
          %s145 = sshll.u32 [#allocation4], 4
          %s146 = int_to_ptr.vmem [resolvable:$true] %s145
          %151 = dma.hbm_to_vmem [thread:$0]  %s144, 1024, %s146, [#allocation5], 64, 64, 4
        $region16: #{tpu_custom_call.1} parent=11 // pred_fallthru
          _
        // Predicated region
        $region17: #{tpu_custom_call.1} parent=11 // pred_check
          %p152 = pneg %p95
        $region18: #{tpu_custom_call.1} parent=11 // pred_check_branch
          %154 = sbr.rel (%p152) target = $region20
        $region19: #{tpu_custom_call.1} parent=11 // pred_region
          _
        $region20: #{tpu_custom_call.1} parent=11 // pred_fallthru
          _
      $region12: #{tpu_custom_call.1} parent=5 // pred_fallthru
        _
      %p155 = scmp.lt.s32.totalorder %s13, 2
      // Predicated region
      $region21: #{tpu_custom_call.1} parent=5 // pred_check
        %p156 = pneg %p155
      $region22: #{tpu_custom_call.1} parent=5 // pred_check_branch
        %158 = sbr.rel (%p156) target = $region24
      $region23: #{tpu_custom_call.1} parent=5 // pred_region
        // Predicated region
        $region25: #{tpu_custom_call.1} parent=23 // pred_check
          %p159 = pneg %p47
        $region26: #{tpu_custom_call.1} parent=23 // pred_check_branch
          %161 = sbr.rel (%p159) target = $region28
        $region27: #{tpu_custom_call.1} parent=23 // pred_region
          %s162 = sand.u32 %s37, 1
          %s163 = scalar_lea.sflag [#allocation3], %s162
          %s164 = sand.u32 %s37, 1
          %s165 = smul.addr %s164, 8
          %s166 = scalar_lea.vmem [#allocation2], %s165
          %s167 = smul.u32 2, %s21
          %169 = vsyncadd %s163, 0
          %s170 = smul.addr %s20, 2
          %s171 = sadd.s32 %s167, %s170
          %s172 = smul.addr %s171, 4
          %s173 = scalar_lea.hbm %s0, %s172
          %s174 = sshll.u32 %s173, 4
          %s175 = int_to_ptr.hbm [resolvable:$true] %s174
          %s176 = sshll.u32 %s166, 4
          %s177 = int_to_ptr.vmem [resolvable:$true] %s176
          %182 = dma.hbm_to_vmem [thread:$0]  %s175, 128, %s177, %s163, 64, 64, 4
        $region28: #{tpu_custom_call.1} parent=23 // pred_fallthru
          _
      $region24: #{tpu_custom_call.1} parent=5 // pred_fallthru
        _
      %p183 = scmp.le.s32.totalorder 1, %s13
      %p184 = scmp.lt.s32.totalorder %s13, 3
      %p185 = pnand %p183, %p184
      %p186 = pneg %p185
      // Predicated region
      $region29: #{tpu_custom_call.1} parent=5 // pred_check
        _
      $region30: #{tpu_custom_call.1} parent=5 // pred_check_branch
        %188 = sbr.rel (%p185) target = $region32
      $region31: #{tpu_custom_call.1} parent=5 // pred_region
        %s189 = ssub.s32 %s13, 1
        %s190 = sand.u32 %s40, 1
        %s191 = scalar_lea.sflag [#allocation3], %s190
        %s192 = sand.u32 %s40, 1
        %s193 = smul.addr %s192, 8
        %s194 = scalar_lea.vmem [#allocation2], %s193
        // Predicated region
        $region33: #{tpu_custom_call.1} parent=31 // pred_check
          %p195 = pneg %p53
        $region34: #{tpu_custom_call.1} parent=31 // pred_check_branch
          %197 = sbr.rel (%p195) target = $region36
        $region35: #{tpu_custom_call.1} parent=31 // pred_region
          %199 = dma.done %s191, 128
        $region36: #{tpu_custom_call.1} parent=31 // pred_fallthru
          _
        // Predicated region
        $region37: #{tpu_custom_call.1} parent=31 // pred_check
          %p200 = pneg %p74
        $region38: #{tpu_custom_call.1} parent=31 // pred_check_branch
          %202 = sbr.rel (%p200) target = $region40
        $region39: #{tpu_custom_call.1} parent=31 // pred_region
          %204 = dma.done [#allocation5], 1024
        $region40: #{tpu_custom_call.1} parent=31 // pred_fallthru
          _
        %s205 = sand.u32 %s40, 1
        %s206 = scalar_lea.sflag [#allocation3], %s205
        %s207 = sand.u32 %s40, 1
        %s208 = smul.addr %s207, 8
        %s209 = scalar_lea.vmem [#allocation2], %s208
        %p210 = pneg %p53
        %p211 = pneg %p50
        %p212 = pneg %p74
        %p213 = pneg %p71
        %p214 = pneg %p95
        %p215 = pneg %p92
        %p216 = pneg %p123
        %p217 = pneg %p120
        %p218 = scmp.lt.s32.totalorder %s22, 1
        %s219 = scalar_select %p218, %s22, 1
        %p220 = scmp.lt.s32.totalorder %s23, 0
        %s221 = scalar_select %p220, %s23, 0
        %s222 = smul.addr %s219, 4
        %s223 = sadd.s32 %s221, %s222
        %s224 = smul.addr %s223, 8
        %s225 = scalar_lea.vmem %s3, %s224
        %s226 = smul.u32 2, %s23
        %p227 = scmp.lt.s32.totalorder %s22, 1
        %s228 = scalar_select %p227, %s22, 1
        %p229 = scmp.lt.s32.totalorder %s23, 0
        %s230 = scalar_select %p229, %s23, 0
        %s231 = smul.addr %s228, 4
        %s232 = sadd.s32 %s230, %s231
        %s233 = smul.addr %s232, 8
        %s234 = scalar_lea.vmem %s3, %s233
        %v235 = vld [vmem:[%s194] sm:$0xf]
        %v236 = vld [vmem:[%s194 + $0x4] sm:$0xf]
        %v237 = vld [vmem:[#allocation4] sm:$0xf]
        %v238 = vld [vmem:[#allocation4 + $0x4] sm:$0xf]
        %v239 = vld [vmem:[#allocation4 + $0x8] sm:$0xf]
        %v240 = vld [vmem:[#allocation4 + $0xc] sm:$0xf]
        %v241 = vld [vmem:[#allocation4 + $0x10] sm:$0xf]
        %v242 = vld [vmem:[#allocation4 + $0x14] sm:$0xf]
        %v243 = vld [vmem:[#allocation4 + $0x18] sm:$0xf]
        %v244 = vld [vmem:[#allocation4 + $0x1c] sm:$0xf]
        %v245 = vld [vmem:[#allocation4 + $0x20] sm:$0xf]
        %v246 = vld [vmem:[#allocation4 + $0x24] sm:$0xf]
        %v247 = vld [vmem:[#allocation4 + $0x28] sm:$0xf]
        %v248 = vld [vmem:[#allocation4 + $0x2c] sm:$0xf]
        %v249 = vld [vmem:[#allocation4 + $0x30] sm:$0xf]
        %v250 = vld [vmem:[#allocation4 + $0x34] sm:$0xf]
        %v251 = vld [vmem:[#allocation4 + $0x38] sm:$0xf]
        %v252 = vld [vmem:[#allocation4 + $0x3c] sm:$0xf]
        %v253 = vld [vmem:[%s2] sm:$0x1]
        %v255 = vperm.slane %v253, 0
        %v259 = vunpack.c.l.b16 %v235
        %v260 = vunpack.c.l.b16 %v236
        %v261 = vpack.c.b16 %v260, %v259
        %v279 = vunpack.c.l.b16 %v237
        %v280 = vunpack.c.l.b16 %v238
        %v281 = vunpack.c.l.b16 %v239
        %v282 = vunpack.c.l.b16 %v240
        %v283 = vunpack.c.l.b16 %v241
        %v284 = vunpack.c.l.b16 %v242
        %v285 = vunpack.c.l.b16 %v243
        %v286 = vunpack.c.l.b16 %v244
        %v287 = vunpack.c.l.b16 %v245
        %v288 = vunpack.c.l.b16 %v246
        %v289 = vunpack.c.l.b16 %v247
        %v290 = vunpack.c.l.b16 %v248
        %v291 = vunpack.c.l.b16 %v249
        %v292 = vunpack.c.l.b16 %v250
        %v293 = vunpack.c.l.b16 %v251
        %v294 = vunpack.c.l.b16 %v252
        %v295 = vpack.c.b16 %v280, %v279
        %v296 = vpack.c.b16 %v282, %v281
        %v297 = vpack.c.b16 %v284, %v283
        %v298 = vpack.c.b16 %v286, %v285
        %v299 = vpack.c.b16 %v288, %v287
        %v300 = vpack.c.b16 %v290, %v289
        %v301 = vpack.c.b16 %v292, %v291
        %v302 = vpack.c.b16 %v294, %v293
        %311 = vmatpush.bf16.msra.mxu0 %v302
        %312 = vmatpush.bf16.msra.mxu0 %v301
        %313 = vmatpush.bf16.msra.mxu0 %v300
        %314 = vmatpush.bf16.msra.mxu0 %v299
        %315 = vmatpush.bf16.msra.mxu0 %v298
        %316 = vmatpush.bf16.msra.mxu0 %v297
        %317 = vmatpush.bf16.msra.mxu0 %v296
        %318 = vmatpush.bf16.msra.mxu0 %v295
        %319 = vmatmul.bf16.gmra.mxu0 %v261
        %v320 = vpop.f32.mrf.mxu0
        %v321 = vadd.f32 %v255, %v320
        %v322 = vpop.f32.mrf.mxu0
        %v323 = vadd.f32 %v255, %v322
        %324 = vdwg.mxu0
        %325 = vxpose.xlu0.b32.start [1/16] %v321, 128
        %326 = vxpose.xlu0.b32.cont [2/16] %v323, 128
        %327 = vxpose.xlu0.b32.cont [3/16] 0.0, 128
        %328 = vxpose.xlu0.b32.cont [4/16] 0.0, 128
        %329 = vxpose.xlu0.b32.cont [5/16] 0.0, 128
        %330 = vxpose.xlu0.b32.cont [6/16] 0.0, 128
        %331 = vxpose.xlu0.b32.cont [7/16] 0.0, 128
        %332 = vxpose.xlu0.b32.cont [8/16] 0.0, 128
        %333 = vxpose.xlu0.b32.cont [9/16] 0.0, 128
        %334 = vxpose.xlu0.b32.cont [10/16] 0.0, 128
        %335 = vxpose.xlu0.b32.cont [11/16] 0.0, 128
        %336 = vxpose.xlu0.b32.cont [12/16] 0.0, 128
        %337 = vxpose.xlu0.b32.cont [13/16] 0.0, 128
        %338 = vxpose.xlu0.b32.cont [14/16] 0.0, 128
        %339 = vxpose.xlu0.b32.cont [15/16] 0.0, 128
        %340 = vxpose.xlu0.b32.end [16/16] 0.0, 128
        %v341 = vpop.trf.xlu0
        %v342 = vpop.trf.xlu0
        %v343 = vpop.trf.xlu0
        %v344 = vpop.trf.xlu0
        %v345 = vpop.trf.xlu0
        %v346 = vpop.trf.xlu0
        %v347 = vpop.trf.xlu0
        %v348 = vpop.trf.xlu0
        %v349 = vpop.trf.xlu0
        %v350 = vpop.trf.xlu0
        %v351 = vpop.trf.xlu0
        %v352 = vpop.trf.xlu0
        %v353 = vpop.trf.xlu0
        %v354 = vpop.trf.xlu0
        %v355 = vpop.trf.xlu0
        %v356 = vpop.trf.xlu0
        %vm357 = vcmask 130048
        %358 = vst.msk [vmem:[%s234] sm:$0xff] %vm357, %v341
        %359 = vst.msk [vmem:[%s234 + $0x8] sm:$0xff] %vm357, %v342
        %360 = vst.msk [vmem:[%s234 + $0x10] sm:$0xff] %vm357, %v343
        %361 = vst.msk [vmem:[%s234 + $0x18] sm:$0xff] %vm357, %v344
        %p362 = scmp.lt.s32.totalorder %s22, 1
        %s363 = scalar_select %p362, %s22, 1
        %p364 = scmp.lt.s32.totalorder %s23, 0
        %s365 = scalar_select %p364, %s23, 0
        %s366 = smul.addr %s363, 4
        %s367 = sadd.s32 %s365, %s366
        %s368 = smul.addr %s367, 8
        %s369 = scalar_lea.vmem %s3, %s368
        // Predicated region
        $region41: #{tpu_custom_call.1} parent=31 // pred_check
          %p370 = pneg %p120
        $region42: #{tpu_custom_call.1} parent=31 // pred_check_branch
          %372 = sbr.rel (%p370) target = $region44
        $region43: #{tpu_custom_call.1} parent=31 // pred_region
          _
        $region44: #{tpu_custom_call.1} parent=31 // pred_fallthru
          _
      $region32: #{tpu_custom_call.1} parent=5 // pred_fallthru
        _
      %p373 = scmp.le.s32.totalorder 2, %s13
      // Predicated region
      $region45: #{tpu_custom_call.1} parent=5 // pred_check
        %p374 = pneg %p373
      $region46: #{tpu_custom_call.1} parent=5 // pred_check_branch
        %376 = sbr.rel (%p374) target = $region48
      $region47: #{tpu_custom_call.1} parent=5 // pred_region
        %s377 = ssub.s32 %s13, 2
        // Predicated region
        $region49: #{tpu_custom_call.1} parent=47 // pred_check
          %p378 = pneg %p126
        $region50: #{tpu_custom_call.1} parent=47 // pred_check_branch
          %380 = sbr.rel (%p378) target = $region52
        $region51: #{tpu_custom_call.1} parent=47 // pred_region
          %p381 = scmp.lt.s32.totalorder %s24, 1
          %s382 = scalar_select %p381, %s24, 1
          %p383 = scmp.lt.s32.totalorder %s25, 0
          %s384 = scalar_select %p383, %s25, 0
          %s385 = smul.addr %s382, 4
          %s386 = sadd.s32 %s384, %s385
          %s387 = smul.addr %s386, 8
          %s388 = scalar_lea.vmem %s3, %s387
        $region52: #{tpu_custom_call.1} parent=47 // pred_fallthru
          _
      $region48: #{tpu_custom_call.1} parent=5 // pred_fallthru
        _
    $region6: #{tpu_custom_call.1} parent=1 // loop_footer
      %s17 = sadd.s32 1, %s13
    $region7: #{tpu_custom_call.1} parent=1 // loop_footer_branch
      %12 = sbr.rel target = $region3
    $region8: #{tpu_custom_call.1} parent=1 // loop_exit
      _
    %389 = vsyncpa [#allocation3], 1
    %s390 = scalar_lea.sflag [#allocation3], 1
    %391 = vsyncpa %s390, 1
    %392 = vsyncpa [#allocation5], 1

// kernel: tpu_custom_call.1
$region0: #{tpu_custom_call.1}
  #allocation0 [shape = 'u32[]', space=smem, size = 0x4, offset = 0x4, fixed_abs, tag = 'smem constant byte address 0x4 - core index']
  #allocation1 [shape = 'u32[72,128]{1,0:T(1,128)}', space=vmem, size = 0x9000, scoped, tag = 'internal scratch']
  %s0 = inlined_call_operand.hbm [shape: bf16[2,16,128], index: 0, kind: input, shape index: {}]
  %s1 = inlined_call_operand.hbm [shape: bf16[128,128], index: 1, kind: input, shape index: {}]
  %s2 = inlined_call_operand.vmem [shape: f32[1,128], index: 2, kind: input, shape index: {}]
  %s3 = inlined_call_operand.vmem [shape: f32[2,32,16], index: 3, kind: output, shape index: {}]
  %s4 = sld [smem:[#allocation0]]
  $region53: #{tpu_custom_call.1} parent=0
    _
  %s6 = ssub.s32 1, %s4
  %s7 = scalar_select 0, %s6, %s4
  $region1: #{tpu_custom_call.1} parent=0
    #allocation2 [shape = 'u8[8192]{0}', space=vmem, size = 0x2000, scoped, tag = 'input window, operand 0']
    #allocation3 [shape = 's32[2]{0}', space=sflag, size = 0x8, scoped, tag = 'scoped memory for tpu_custom_call.1']
    #allocation4 [shape = 'u8[32768]{0}', space=vmem, size = 0x8000, scoped, tag = 'input window, operand 1, single buffered']
    #allocation5 [shape = 's32[1]{0}', space=sflag, size = 0x4, scoped, tag = 'scoped memory for tpu_custom_call.1']
    %8 = vsyncpa [#allocation3], 0
    %s9 = scalar_lea.sflag [#allocation3], 1
    %10 = vsyncpa %s9, 0
    %11 = vsyncpa [#allocation5], 0
    loop: start=0, step=1, limit=4
    $region2: #{tpu_custom_call.1} parent=1 // loop_pre_header
      _
    $region3: #{tpu_custom_call.1} parent=1 // loop_header
      %s13 = sphi 0, %s17
      %p14 = scmp.ge.s32.totalorder %s13, 4
      %s20 = sphi 0, %s32
      %s21 = sphi 0, %s28
      %s22 = sphi 0, %s20
      %s23 = sphi 0, %s21
      %s24 = sphi 0, %s22
      %s25 = sphi 0, %s23
      %s37 = sphi 0, %s39
      %s40 = sphi 0, %s37
      %s41 = sphi 0, %s40
      %s57 = sphi 0, %s41
      %s61 = sphi 0, %s61
      %s63 = sphi 0, %s61
      %s64 = sphi 0, %s63
      %s78 = sphi 0, %s64
      %s82 = sphi 0, %s82
      %s84 = sphi 0, %s82
      %s85 = sphi 0, %s84
      %s99 = sphi 0, %s85
      %s107 = sphi 0, %s109
      %s110 = sphi 0, %s107
      %s111 = sphi 0, %s110
      %s127 = sphi 0, %s111
    $region4: #{tpu_custom_call.1} parent=1 // loop_header_branch
      %16 = sbr.rel (%p14) target = $region8
    $region5: #{tpu_custom_call.1} parent=1 // loop_body
      %s18 = ssub.s32 %s13, 1
      %s19 = ssub.s32 %s13, 2
      %s26 = sadd.s32 1, %s21
      %p27 = scmp.ge.s32.totalorder %s26, 1
      %s28 = scalar_select %p27, 0, %s26
      %s29 = sadd.s32 1, %s20
      %s30 = scalar_select %p27, %s29, %s20
      %p31 = scmp.ge.s32.totalorder %s30, 2
      %s32 = scalar_select %p31, 0, %s30
      %s33 = ssub.s32 %s20, %s32
      %s34 = ssub.s32 %s21, %s28
      %s35 = sor.u32 %s33, %s34
      %p36 = scmp.eq.s32.totalorder %s35, 0
      %s38 = sadd.s32 %s37, 1
      %s39 = scalar_select %p36, %s37, %s38
      %p42 = pneg %p36
      %p43 = scmp.eq.s32.totalorder %s13, 1
      %p44 = por %p42, %p43
      %p45 = scmp.ne.s32.totalorder %s37, %s40
      %p46 = scmp.eq.s32.totalorder %s13, 0
      %p47 = por %p45, %p46
      %p48 = scmp.ne.s32.totalorder %s37, %s40
      %p49 = scmp.eq.s32.totalorder %s18, 1
      %p50 = por %p48, %p49
      %p51 = scmp.ne.s32.totalorder %s40, %s41
      %p52 = scmp.eq.s32.totalorder %s18, 0
      %p53 = por %p51, %p52
      %p54 = scmp.ne.s32.totalorder %s40, %s41
      %p55 = scmp.eq.s32.totalorder %s19, 1
      %p56 = por %p54, %p55
      %p58 = scmp.ne.s32.totalorder %s41, %s57
      %p59 = scmp.eq.s32.totalorder %s19, 0
      %p60 = por %p58, %p59
      %s62 = sadd.s32 %s61, 1
      %p65 = scmp.eq.s32.totalorder %s13, 1
      %p66 = scmp.ne.s32.totalorder %s61, %s63
      %p67 = scmp.eq.s32.totalorder %s13, 0
      %p68 = por %p66, %p67
      %p69 = scmp.ne.s32.totalorder %s61, %s63
      %p70 = scmp.eq.s32.totalorder %s18, 1
      %p71 = por %p69, %p70
      %p72 = scmp.ne.s32.totalorder %s63, %s64
      %p73 = scmp.eq.s32.totalorder %s18, 0
      %p74 = por %p72, %p73
      %p75 = scmp.ne.s32.totalorder %s63, %s64
      %p76 = scmp.eq.s32.totalorder %s19, 1
      %p77 = por %p75, %p76
      %p79 = scmp.ne.s32.totalorder %s64, %s78
      %p80 = scmp.eq.s32.totalorder %s19, 0
      %p81 = por %p79, %p80
      %s83 = sadd.s32 %s82, 1
      %p86 = scmp.eq.s32.totalorder %s13, 1
      %p87 = scmp.ne.s32.totalorder %s82, %s84
      %p88 = scmp.eq.s32.totalorder %s13, 0
      %p89 = por %p87, %p88
      %p90 = scmp.ne.s32.totalorder %s82, %s84
      %p91 = scmp.eq.s32.totalorder %s18, 1
      %p92 = por %p90, %p91
      %p93 = scmp.ne.s32.totalorder %s84, %s85
      %p94 = scmp.eq.s32.totalorder %s18, 0
      %p95 = por %p93, %p94
      %p96 = scmp.ne.s32.totalorder %s84, %s85
      %p97 = scmp.eq.s32.totalorder %s19, 1
      %p98 = por %p96, %p97
      %p100 = scmp.ne.s32.totalorder %s85, %s99
      %p101 = scmp.eq.s32.totalorder %s19, 0
      %p102 = por %p100, %p101
      %s103 = ssub.s32 %s20, %s32
      %s104 = ssub.s32 %s21, %s28
      %s105 = sor.u32 %s103, %s104
      %p106 = scmp.eq.s32.totalorder %s105, 0
      %s108 = sadd.s32 %s107, 1
      %s109 = scalar_select %p106, %s107, %s108
      %p112 = pneg %p106
      %p113 = scmp.eq.s32.totalorder %s13, 1
      %p114 = por %p112, %p113
      %p115 = scmp.ne.s32.totalorder %s107, %s110
      %p116 = scmp.eq.s32.totalorder %s13, 0
      %p117 = por %p115, %p116
      %p118 = scmp.ne.s32.totalorder %s107, %s110
      %p119 = scmp.eq.s32.totalorder %s18, 1
      %p120 = por %p118, %p119
      %p121 = scmp.ne.s32.totalorder %s110, %s111
      %p122 = scmp.eq.s32.totalorder %s18, 0
      %p123 = por %p121, %p122
      %p124 = scmp.ne.s32.totalorder %s110, %s111
      %p125 = scmp.eq.s32.totalorder %s19, 1
      %p126 = por %p124, %p125
      %p128 = scmp.ne.s32.totalorder %s111, %s127
      %p129 = scmp.eq.s32.totalorder %s19, 0
      %p130 = por %p128, %p129
      %p131 = scmp.le.s32.totalorder 1, %s13
      %p132 = scmp.lt.s32.totalorder %s13, 3
      %p133 = pnand %p131, %p132
      %p134 = pneg %p133
      // Predicated region
      $region9: #{tpu_custom_call.1} parent=5 // pred_check
        _
      $region10: #{tpu_custom_call.1} parent=5 // pred_check_branch
        %136 = sbr.rel (%p133) target = $region12
      $region11: #{tpu_custom_call.1} parent=5 // pred_region
        %s137 = ssub.s32 %s13, 1
        // Predicated region
        $region13: #{tpu_custom_call.1} parent=11 // pred_check
          %p138 = pneg %p74
        $region14: #{tpu_custom_call.1} parent=11 // pred_check_branch
          %140 = sbr.rel (%p138) target = $region16
        $region15: #{tpu_custom_call.1} parent=11 // pred_region
          %142 = vsyncadd [#allocation5], 0
          %s143 = sshll.u32 %s1, 4
          %s144 = int_to_ptr.hbm [resolvable:$true] %s143
          %s145 = sshll.u32 [#allocation4], 4
          %s146 = int_to_ptr.vmem [resolvable:$true] %s145
          %151 = dma.hbm_to_vmem [thread:$0]  %s144, 1024, %s146, [#allocation5], 64, 64, 4
        $region16: #{tpu_custom_call.1} parent=11 // pred_fallthru
          _
        // Predicated region
        $region17: #{tpu_custom_call.1} parent=11 // pred_check
          %p152 = pneg %p95
        $region18: #{tpu_custom_call.1} parent=11 // pred_check_branch
          %154 = sbr.rel (%p152) target = $region20
        $region19: #{tpu_custom_call.1} parent=11 // pred_region
          _
        $region20: #{tpu_custom_call.1} parent=11 // pred_fallthru
          _
      $region12: #{tpu_custom_call.1} parent=5 // pred_fallthru
        _
      %p155 = scmp.lt.s32.totalorder %s13, 2
      // Predicated region
      $region21: #{tpu_custom_call.1} parent=5 // pred_check
        %p156 = pneg %p155
      $region22: #{tpu_custom_call.1} parent=5 // pred_check_branch
        %158 = sbr.rel (%p156) target = $region24
      $region23: #{tpu_custom_call.1} parent=5 // pred_region
        // Predicated region
        $region25: #{tpu_custom_call.1} parent=23 // pred_check
          %p159 = pneg %p47
        $region26: #{tpu_custom_call.1} parent=23 // pred_check_branch
          %161 = sbr.rel (%p159) target = $region28
        $region27: #{tpu_custom_call.1} parent=23 // pred_region
          %s162 = sand.u32 %s37, 1
          %s163 = scalar_lea.sflag [#allocation3], %s162
          %s164 = sand.u32 %s37, 1
          %s165 = smul.addr %s164, 8
          %s166 = scalar_lea.vmem [#allocation2], %s165
          %s167 = smul.u32 2, %s21
          %169 = vsyncadd %s163, 0
          %s170 = smul.addr %s20, 2
          %s171 = sadd.s32 %s167, %s170
          %s172 = smul.addr %s171, 4
          %s173 = scalar_lea.hbm %s0, %s172
          %s174 = sshll.u32 %s173, 4
          %s175 = int_to_ptr.hbm [resolvable:$true] %s174
          %s176 = sshll.u32 %s166, 4
          %s177 = int_to_ptr.vmem [resolvable:$true] %s176
          %182 = dma.hbm_to_vmem [thread:$0]  %s175, 128, %s177, %s163, 64, 64, 4
        $region28: #{tpu_custom_call.1} parent=23 // pred_fallthru
          _
      $region24: #{tpu_custom_call.1} parent=5 // pred_fallthru
        _
      %p183 = scmp.le.s32.totalorder 1, %s13
      %p184 = scmp.lt.s32.totalorder %s13, 3
      %p185 = pnand %p183, %p184
      %p186 = pneg %p185
      // Predicated region
      $region29: #{tpu_custom_call.1} parent=5 // pred_check
        _
      $region30: #{tpu_custom_call.1} parent=5 // pred_check_branch
        %188 = sbr.rel (%p185) target = $region32
      $region31: #{tpu_custom_call.1} parent=5 // pred_region
        %s189 = ssub.s32 %s13, 1
        %s190 = sand.u32 %s40, 1
        %s191 = scalar_lea.sflag [#allocation3], %s190
        %s192 = sand.u32 %s40, 1
        %s193 = smul.addr %s192, 8
        %s194 = scalar_lea.vmem [#allocation2], %s193
        // Predicated region
        $region33: #{tpu_custom_call.1} parent=31 // pred_check
          %p195 = pneg %p53
        $region34: #{tpu_custom_call.1} parent=31 // pred_check_branch
          %197 = sbr.rel (%p195) target = $region36
        $region35: #{tpu_custom_call.1} parent=31 // pred_region
          %199 = dma.done %s191, 128
        $region36: #{tpu_custom_call.1} parent=31 // pred_fallthru
          _
        // Predicated region
        $region37: #{tpu_custom_call.1} parent=31 // pred_check
          %p200 = pneg %p74
        $region38: #{tpu_custom_call.1} parent=31 // pred_check_branch
          %202 = sbr.rel (%p200) target = $region40
        $region39: #{tpu_custom_call.1} parent=31 // pred_region
          %204 = dma.done [#allocation5], 1024
        $region40: #{tpu_custom_call.1} parent=31 // pred_fallthru
          _
        %s205 = sand.u32 %s40, 1
        %s206 = scalar_lea.sflag [#allocation3], %s205
        %s207 = sand.u32 %s40, 1
        %s208 = smul.addr %s207, 8
        %s209 = scalar_lea.vmem [#allocation2], %s208
        %p210 = pneg %p53
        %p211 = pneg %p50
        %p212 = pneg %p74
        %p213 = pneg %p71
        %p214 = pneg %p95
        %p215 = pneg %p92
        %p216 = pneg %p123
        %p217 = pneg %p120
        %p218 = scmp.lt.s32.totalorder %s22, 1
        %s219 = scalar_select %p218, %s22, 1
        %p220 = scmp.lt.s32.totalorder %s23, 0
        %s221 = scalar_select %p220, %s23, 0
        %s222 = smul.addr %s219, 4
        %s223 = sadd.s32 %s221, %s222
        %s224 = smul.addr %s223, 8
        %s225 = scalar_lea.vmem %s3, %s224
        %s226 = smul.u32 2, %s23
        %p227 = scmp.lt.s32.totalorder %s22, 1
        %s228 = scalar_select %p227, %s22, 1
        %p229 = scmp.lt.s32.totalorder %s23, 0
        %s230 = scalar_select %p229, %s23, 0
        %s231 = smul.addr %s228, 4
        %s232 = sadd.s32 %s230, %s231
        %s233 = smul.addr %s232, 8
        %s234 = scalar_lea.vmem %s3, %s233
        %v235 = vld [vmem:[%s194] sm:$0xf]
        %v236 = vld [vmem:[%s194 + $0x4] sm:$0xf]
        %v237 = vld [vmem:[#allocation4] sm:$0xf]
        %v238 = vld [vmem:[#allocation4 + $0x4] sm:$0xf]
        %v239 = vld [vmem:[#allocation4 + $0x8] sm:$0xf]
        %v240 = vld [vmem:[#allocation4 + $0xc] sm:$0xf]
        %v241 = vld [vmem:[#allocation4 + $0x10] sm:$0xf]
        %v242 = vld [vmem:[#allocation4 + $0x14] sm:$0xf]
        %v243 = vld [vmem:[#allocation4 + $0x18] sm:$0xf]
        %v244 = vld [vmem:[#allocation4 + $0x1c] sm:$0xf]
        %v245 = vld [vmem:[#allocation4 + $0x20] sm:$0xf]
        %v246 = vld [vmem:[#allocation4 + $0x24] sm:$0xf]
        %v247 = vld [vmem:[#allocation4 + $0x28] sm:$0xf]
        %v248 = vld [vmem:[#allocation4 + $0x2c] sm:$0xf]
        %v249 = vld [vmem:[#allocation4 + $0x30] sm:$0xf]
        %v250 = vld [vmem:[#allocation4 + $0x34] sm:$0xf]
        %v251 = vld [vmem:[#allocation4 + $0x38] sm:$0xf]
        %v252 = vld [vmem:[#allocation4 + $0x3c] sm:$0xf]
        %v253 = vld [vmem:[%s2] sm:$0x1]
        %v255 = vperm.slane %v253, 0
        %v259 = vunpack.c.l.b16 %v235
        %v260 = vunpack.c.l.b16 %v236
        %v261 = vpack.c.b16 %v260, %v259
        %v279 = vunpack.c.l.b16 %v237
        %v280 = vunpack.c.l.b16 %v238
        %v281 = vunpack.c.l.b16 %v239
        %v282 = vunpack.c.l.b16 %v240
        %v283 = vunpack.c.l.b16 %v241
        %v284 = vunpack.c.l.b16 %v242
        %v285 = vunpack.c.l.b16 %v243
        %v286 = vunpack.c.l.b16 %v244
        %v287 = vunpack.c.l.b16 %v245
        %v288 = vunpack.c.l.b16 %v246
        %v289 = vunpack.c.l.b16 %v247
        %v290 = vunpack.c.l.b16 %v248
        %v291 = vunpack.c.l.b16 %v249
        %v292 = vunpack.c.l.b16 %v250
        %v293 = vunpack.c.l.b16 %v251
        %v294 = vunpack.c.l.b16 %v252
        %v295 = vpack.c.b16 %v280, %v279
        %v296 = vpack.c.b16 %v282, %v281
        %v297 = vpack.c.b16 %v284, %v283
        %v298 = vpack.c.b16 %v286, %v285
        %v299 = vpack.c.b16 %v288, %v287
        %v300 = vpack.c.b16 %v290, %v289
        %v301 = vpack.c.b16 %v292, %v291
        %v302 = vpack.c.b16 %v294, %v293
        %311 = vmatpush.bf16.msra.mxu0 %v302
        %312 = vmatpush.bf16.msra.mxu0 %v301
        %313 = vmatpush.bf16.msra.mxu0 %v300
        %314 = vmatpush.bf16.msra.mxu0 %v299
        %315 = vmatpush.bf16.msra.mxu0 %v298
        %316 = vmatpush.bf16.msra.mxu0 %v297
        %317 = vmatpush.bf16.msra.mxu0 %v296
        %318 = vmatpush.bf16.msra.mxu0 %v295
        %319 = vmatmul.bf16.gmra.mxu0 %v261
        %v320 = vpop.f32.mrf.mxu0
        %v321 = vadd.f32 %v255, %v320
        %v322 = vpop.f32.mrf.mxu0
        %v323 = vadd.f32 %v255, %v322
        %324 = vdwg.mxu0
        %325 = vxpose.xlu0.b32.start [1/16] %v321, 128
        %326 = vxpose.xlu0.b32.cont [2/16] %v323, 128
        %327 = vxpose.xlu0.b32.cont [3/16] 0.0, 128
        %328 = vxpose.xlu0.b32.cont [4/16] 0.0, 128
        %329 = vxpose.xlu0.b32.cont [5/16] 0.0, 128
        %330 = vxpose.xlu0.b32.cont [6/16] 0.0, 128
        %331 = vxpose.xlu0.b32.cont [7/16] 0.0, 128
        %332 = vxpose.xlu0.b32.cont [8/16] 0.0, 128
        %333 = vxpose.xlu0.b32.cont [9/16] 0.0, 128
        %334 = vxpose.xlu0.b32.cont [10/16] 0.0, 128
        %335 = vxpose.xlu0.b32.cont [11/16] 0.0, 128
        %336 = vxpose.xlu0.b32.cont [12/16] 0.0, 128
        %337 = vxpose.xlu0.b32.cont [13/16] 0.0, 128
        %338 = vxpose.xlu0.b32.cont [14/16] 0.0, 128
        %339 = vxpose.xlu0.b32.cont [15/16] 0.0, 128
        %340 = vxpose.xlu0.b32.end [16/16] 0.0, 128
        %v341 = vpop.trf.xlu0
        %v342 = vpop.trf.xlu0
        %v343 = vpop.trf.xlu0
        %v344 = vpop.trf.xlu0
        %v345 = vpop.trf.xlu0
        %v346 = vpop.trf.xlu0
        %v347 = vpop.trf.xlu0
        %v348 = vpop.trf.xlu0
        %v349 = vpop.trf.xlu0
        %v350 = vpop.trf.xlu0
        %v351 = vpop.trf.xlu0
        %v352 = vpop.trf.xlu0
        %v353 = vpop.trf.xlu0
        %v354 = vpop.trf.xlu0
        %v355 = vpop.trf.xlu0
        %v356 = vpop.trf.xlu0
        %vm357 = vcmask 130048
        %358 = vst.msk [vmem:[%s234] sm:$0xff] %vm357, %v341
        %359 = vst.msk [vmem:[%s234 + $0x8] sm:$0xff] %vm357, %v342
        %360 = vst.msk [vmem:[%s234 + $0x10] sm:$0xff] %vm357, %v343
        %361 = vst.msk [vmem:[%s234 + $0x18] sm:$0xff] %vm357, %v344
        %p362 = scmp.lt.s32.totalorder %s22, 1
        %s363 = scalar_select %p362, %s22, 1
        %p364 = scmp.lt.s32.totalorder %s23, 0
        %s365 = scalar_select %p364, %s23, 0
        %s366 = smul.addr %s363, 4
        %s367 = sadd.s32 %s365, %s366
        %s368 = smul.addr %s367, 8
        %s369 = scalar_lea.vmem %s3, %s368
        // Predicated region
        $region41: #{tpu_custom_call.1} parent=31 // pred_check
          %p370 = pneg %p120
        $region42: #{tpu_custom_call.1} parent=31 // pred_check_branch
          %372 = sbr.rel (%p370) target = $region44
        $region43: #{tpu_custom_call.1} parent=31 // pred_region
          _
        $region44: #{tpu_custom_call.1} parent=31 // pred_fallthru
          _
      $region32: #{tpu_custom_call.1} parent=5 // pred_fallthru
        _
      %p373 = scmp.le.s32.totalorder 2, %s13
      // Predicated region
      $region45: #{tpu_custom_call.1} parent=5 // pred_check
        %p374 = pneg %p373
      $region46: #{tpu_custom_call.1} parent=5 // pred_check_branch
        %376 = sbr.rel (%p374) target = $region48
      $region47: #{tpu_custom_call.1} parent=5 // pred_region
        %s377 = ssub.s32 %s13, 2
        // Predicated region
        $region49: #{tpu_custom_call.1} parent=47 // pred_check
          %p378 = pneg %p126
        $region50: #{tpu_custom_call.1} parent=47 // pred_check_branch
          %380 = sbr.rel (%p378) target = $region52
        $region51: #{tpu_custom_call.1} parent=47 // pred_region
          %p381 = scmp.lt.s32.totalorder %s24, 1
          %s382 = scalar_select %p381, %s24, 1
          %p383 = scmp.lt.s32.totalorder %s25, 0
          %s384 = scalar_select %p383, %s25, 0
          %s385 = smul.addr %s382, 4
          %s386 = sadd.s32 %s384, %s385
          %s387 = smul.addr %s386, 8
          %s388 = scalar_lea.vmem %s3, %s387
        $region52: #{tpu_custom_call.1} parent=47 // pred_fallthru
          _
      $region48: #{tpu_custom_call.1} parent=5 // pred_fallthru
        _
    $region6: #{tpu_custom_call.1} parent=1 // loop_footer
      %s17 = sadd.s32 1, %s13
    $region7: #{tpu_custom_call.1} parent=1 // loop_footer_branch
      %12 = sbr.rel target = $region3
    $region8: #{tpu_custom_call.1} parent=1 // loop_exit
      _
    %389 = vsyncpa [#allocation3], 1
    %s390 = scalar_lea.sflag [#allocation3], 1
    %391 = vsyncpa %s390, 1
    %392 = vsyncpa [#allocation5], 1

</llo_original>
